<compile_context>
chip_gen: v7x
topology: tpu7x:2x2x1
jax: 0.10.0
libtpu: 0.0.40
codegen_flags: <defaults>
</compile_context>

<pallas_src>
import math
import functools
from typing import NamedTuple

import jax
import jax.numpy as jnp
from jax import lax
from jax.experimental import pallas as pl
from jax.experimental.pallas import tpu as pltpu

_INV_SQRT2 = 1.0 / math.sqrt(2.0)


def _round_up(a, b):
    return -(-a // b) * b


def _sublane_multiple(dtype):
    return {4: 8, 2: 16, 1: 32}.get(jnp.dtype(dtype).itemsize, 8)


@functools.lru_cache(maxsize=1)
def _vmem_capacity_bytes():
    try:
        return int(pltpu.get_tpu_info().vmem_capacity_bytes)
    except Exception:
        return 64 << 20  # conservative: v7x per-TensorCore VMEM


class GegluPlan(NamedTuple):
    dim_in: int
    dim_out: int
    dim_in_pad: int
    dim_out_pad: int
    tn: int
    tk: int
    tm: int


def _make_plan(dim_in, dim_out, dtype, tm):
    dtype_bytes = jnp.dtype(dtype).itemsize
    sub = _sublane_multiple(dtype)
    tm = max(sub, _round_up(tm, sub))

    # Lane-dense N tile; pad dim_out up to a tn multiple (sliced off later).
    tn = 256 if (dim_out >= 256 and dim_out % 256 == 0) else 128
    dim_out_pad = _round_up(dim_out, tn)

    # K tile: keep dim_in resident if it fits the VMEM budget, otherwise split
    # into 128-aligned chunks (f32 accumulator carries across the K axis).
    budget = _vmem_capacity_bytes() - (16 << 20)

    def fits(tk_):
        tile_bytes = (
            2 * dtype_bytes * (tm * tk_ + tk_ * 2 * tn)   # dbl-buffered x, W
            + 4 * tm * 2 * tn                             # f32 accumulator
            + 2 * dtype_bytes * tm * tn                   # dbl-buffered out
            + 2 * dtype_bytes * 2 * tn                    # bias
        )
        return tile_bytes <= budget

    if fits(dim_in):
        tk = dim_in
        dim_in_pad = dim_in
    else:
        tk = 2048
        while tk > 512 and not fits(tk):
            tk //= 2
        dim_in_pad = _round_up(dim_in, tk)

    return GegluPlan(dim_in, dim_out, dim_in_pad, dim_out_pad, tn, tk, tm)


def geglu_prepare(weight, bias, *, x_dtype=None, tm=512):
    """One-time (weight-load-time) re-layout of PyTorch nn.Linear params.

    weight: (2*dim_out, dim_in), bias: (2*dim_out,).
    Returns (w_fused, b_fused, plan) where w_fused is (dim_in_pad, 2*dim_out_pad)
    with every N tile holding its [value | gate] columns contiguously.
    """
    dim_out2, dim_in = weight.shape
    dim_out = dim_out2 // 2
    assert weight.shape == (2 * dim_out, dim_in)
    assert bias.shape == (2 * dim_out,)

    dtype = weight.dtype if x_dtype is None else x_dtype
    plan = _make_plan(dim_in, dim_out, dtype, tm)
    tn, dim_in_pad, dim_out_pad = plan.tn, plan.dim_in_pad, plan.dim_out_pad
    n_tiles = dim_out_pad // tn

    w_t = weight.T                                   # (dim_in, 2*dim_out)
    w_h = w_t[:, :dim_out]
    w_g = w_t[:, dim_out:]
    pad_k = dim_in_pad - dim_in
    pad_n = dim_out_pad - dim_out
    if pad_k or pad_n:
        w_h = jnp.pad(w_h, ((0, pad_k), (0, pad_n)))
        w_g = jnp.pad(w_g, ((0, pad_k), (0, pad_n)))
    w_h = w_h.reshape(dim_in_pad, n_tiles, tn)
    w_g = w_g.reshape(dim_in_pad, n_tiles, tn)
    w_fused = jnp.concatenate([w_h, w_g], axis=2).reshape(
        dim_in_pad, 2 * dim_out_pad)

    b_h = jnp.pad(bias[:dim_out], (0, pad_n)).reshape(n_tiles, tn)
    b_g = jnp.pad(bias[dim_out:], (0, pad_n)).reshape(n_tiles, tn)
    b_fused = jnp.concatenate([b_h, b_g], axis=1).reshape(1, 2 * dim_out_pad)

    return w_fused, b_fused, plan


def _geglu_kernel(x_ref, w_ref, b_ref, o_ref, acc_ref):
    # x_ref:   (tm, tk)       input rows, K-slice (native dtype)
    # w_ref:   (tk, 2*tn)     [value | gate] weight columns for this N tile
    # b_ref:   (1, 2*tn)      matching bias columns
    # o_ref:   (tm, tn)       output tile
    # acc_ref: (tm, 2*tn) f32 accumulator across the K axis
    @pl.when(pl.program_id(2) == 0)
    def _():
        acc_ref[...] = jnp.zeros_like(acc_ref)

    acc_ref[...] += jnp.dot(x_ref[...], w_ref[...],
                            preferred_element_type=jnp.float32)

    @pl.when(pl.program_id(2) == pl.num_programs(2) - 1)
    def _():
        tn = o_ref.shape[-1]
        y = acc_ref[...] + b_ref[...].astype(jnp.float32)
        h = y[:, :tn]
        g = y[:, tn:]
        # Exact (erf) GELU in f32, matching torch.nn.functional.gelu default.
        gelu_g = 0.5 * g * (1.0 + lax.erf(g * _INV_SQRT2))
        o_ref[...] = (h * gelu_g).astype(o_ref.dtype)


@functools.partial(jax.jit, static_argnames=("dim_out", "tn", "tk", "tm"))
def _geglu_forward(x, w_fused, b_fused, *, dim_out, tn, tk, tm):
    orig_shape = x.shape
    dim_in = orig_shape[-1]
    dim_in_pad = w_fused.shape[0]
    dim_out_pad = w_fused.shape[1] // 2

    x2d = x.reshape(-1, dim_in)
    m = x2d.shape[0]
    dtype_bytes = jnp.dtype(x.dtype).itemsize
    sub = _sublane_multiple(x.dtype)

    # Row tile: requested (sublane-rounded), but no larger than m rounded up.
    tm_eff = max(sub, min(_round_up(tm, sub), _round_up(m, sub)))
    m_pad = _round_up(m, tm_eff)

    pad_rows = m_pad - m
    pad_k = dim_in_pad - dim_in
    if pad_rows or pad_k:
        x2d = jnp.pad(x2d, ((0, pad_rows), (0, pad_k)))

    n_tiles = dim_out_pad // tn
    m_tiles = m_pad // tm_eff
    k_tiles = dim_in_pad // tk

    cap = _vmem_capacity_bytes()
    tile_bytes = (
        2 * dtype_bytes * (tm_eff * tk + tk * 2 * tn + 2 * tn + tm_eff * tn)
        + 4 * tm_eff * 2 * tn)
    vmem_limit = int(min(cap - (8 << 20),
                         max(32 << 20, tile_bytes + (8 << 20))))

    out = pl.pallas_call(
        _geglu_kernel,
        out_shape=jax.ShapeDtypeStruct((m_pad, dim_out_pad), x.dtype),
        grid_spec=pltpu.PrefetchScalarGridSpec(
            num_scalar_prefetch=0,
            # N outer, M inner of the parallel axes: the W strip for a given N
            # tile stays resident across all row tiles (streamed once total).
            # K (reduction) is last, per convention.
            grid=(n_tiles, m_tiles, k_tiles),
            in_specs=[
                pl.BlockSpec((tm_eff, tk), lambda j, i, k: (i, k)),   # x rows
                pl.BlockSpec((tk, 2 * tn), lambda j, i, k: (k, j)),   # fused W
                pl.BlockSpec((1, 2 * tn), lambda j, i, k: (0, j)),    # fused bias
            ],
            out_specs=pl.BlockSpec((tm_eff, tn), lambda j, i, k: (i, j)),
            scratch_shapes=[pltpu.VMEM((tm_eff, 2 * tn), jnp.float32)],
        ),
        compiler_params=pltpu.CompilerParams(
            dimension_semantics=("parallel", "parallel", "arbitrary"),
            vmem_limit_bytes=vmem_limit,
        ),
    )(x2d, w_fused, b_fused)

    out = out[:m, :dim_out]
    return out.reshape(*orig_shape[:-1], dim_out)


def geglu_pallas(x, w_fused, b_fused, plan: GegluPlan):
    """GEGLU forward using pre-fused params from geglu_prepare."""
    return _geglu_forward(x, w_fused, b_fused, dim_out=plan.dim_out,
                          tn=plan.tn, tk=plan.tk, tm=plan.tm)


def _reference_geglu(x, weight, bias):
    y = x @ weight.T + bias
    h, g = jnp.split(y, 2, axis=-1)
    gelu_g = 0.5 * g * (1.0 + lax.erf(g / jnp.sqrt(2.0).astype(g.dtype)))
    return h * gelu_g


if __name__ == "__main__":
    key = jax.random.PRNGKey(0)
    batch, seq, dim_in, dim_out = 2, 8, 32, 32

    k_x, k_w, k_b = jax.random.split(key, 3)

    # Deterministic synthetic params in PyTorch nn.Linear(dim_in, 2*dim_out) layout.
    weight = jax.random.normal(k_w, (2 * dim_out, dim_in), jnp.float32) * 0.05
    bias = jax.random.normal(k_b, (2 * dim_out,), jnp.float32) * 0.05
    x = jax.random.normal(k_x, (batch, seq, dim_in), jnp.float32)

    # One-time weight re-layout (hoisted out of the forward hot path).
    w_fused, b_fused, plan = geglu_prepare(weight, bias, x_dtype=x.dtype)
    w_fused = jax.block_until_ready(w_fused)

    out = geglu_pallas(x, w_fused, b_fused, plan)
    out = jax.block_until_ready(out)

    ref = _reference_geglu(x, weight, bias)
    assert out.shape == (batch, seq, dim_out)
    assert jnp.allclose(out, ref, atol=2e-5, rtol=2e-5), "mismatch vs reference"

    print("KERNEL_OK")
</pallas_src>

<mosaic_0001>
module attributes {stable_mosaic.version = 11 : i64} {
  func.func @_geglu_kernel(%arg0: i32, %arg1: i32, %arg2: i32, %arg3: memref<16x32xf32, #tpu.memory_space<vmem>>, %arg4: memref<32x256xf32, #tpu.memory_space<vmem>>, %arg5: memref<1x256xf32, #tpu.memory_space<vmem>>, %arg6: memref<16x128xf32, #tpu.memory_space<vmem>>, %arg7: memref<16x256xf32, #tpu.memory_space<vmem>>) attributes {dimension_semantics = [#tpu.dimension_semantics<parallel>, #tpu.dimension_semantics<parallel>, #tpu.dimension_semantics<arbitrary>], iteration_bounds = array<i64: 1, 1, 1>, scalar_prefetch = 0 : i64, scratch_operands = 1 : i64, tpu.core_type = #tpu.core_type<tc>, window_params = [{transform_indices = @transform_0, window_bounds = array<i64: 16, 32>}, {transform_indices = @transform_1, window_bounds = array<i64: 32, 256>}, {transform_indices = @transform_2, window_bounds = array<i64: 1, 256>}, {transform_indices = @transform_3, window_bounds = array<i64: 16, 128>}]} {
    %c0_i32 = arith.constant 0 : i32
    %0 = arith.cmpi eq, %arg2, %c0_i32 : i32
    %1 = arith.extui %0 : i1 to i32
    %c0_i32_0 = arith.constant 0 : i32
    %2 = arith.cmpi ne, %1, %c0_i32_0 : i32
    scf.if %2 {
      %cst_10 = arith.constant 0.000000e+00 : f32
      %12 = vector.broadcast %cst_10 : f32 to vector<16x256xf32>
      %c0_11 = arith.constant 0 : index
      %c0_12 = arith.constant 0 : index
      %13 = vector.load %arg7[%c0_11, %c0_12] : memref<16x256xf32, #tpu.memory_space<vmem>>, vector<16x256xf32>
      tpu.vector_store %arg7[%c0_11, %c0_12], %12 {strides = array<i32>} : memref<16x256xf32, #tpu.memory_space<vmem>>, vector<16x256xf32>,
    } else {
    }
    %c0 = arith.constant 0 : index
    %c0_1 = arith.constant 0 : index
    %3 = vector.load %arg7[%c0, %c0_1] : memref<16x256xf32, #tpu.memory_space<vmem>>, vector<16x256xf32>
    %c0_2 = arith.constant 0 : index
    %c0_3 = arith.constant 0 : index
    %4 = vector.load %arg3[%c0_2, %c0_3] : memref<16x32xf32, #tpu.memory_space<vmem>>, vector<16x32xf32>
    %c0_4 = arith.constant 0 : index
    %c0_5 = arith.constant 0 : index
    %5 = vector.load %arg4[%c0_4, %c0_5] : memref<32x256xf32, #tpu.memory_space<vmem>>, vector<32x256xf32>
    %cst = arith.constant dense<0.000000e+00> : vector<16x256xf32>
    %6 = tpu.matmul %4, %5, %cst {dimension_numbers = #tpu.dot_dimension_numbers<[1], [0], [0], [1], [0, 0, 1, 1], [], []>} : vector<16x32xf32>, vector<32x256xf32>, vector<16x256xf32> -> vector<16x256xf32>
    %7 = arith.addf %3, %6 : vector<16x256xf32>
    %c0_6 = arith.constant 0 : index
    %c0_7 = arith.constant 0 : index
    %8 = vector.load %arg7[%c0_6, %c0_7] : memref<16x256xf32, #tpu.memory_space<vmem>>, vector<16x256xf32>
    tpu.vector_store %arg7[%c0_6, %c0_7], %7 {strides = array<i32>} : memref<16x256xf32, #tpu.memory_space<vmem>>, vector<16x256xf32>,
    %c0_i32_8 = arith.constant 0 : i32
    %9 = arith.cmpi eq, %arg2, %c0_i32_8 : i32
    %10 = arith.extui %9 : i1 to i32
    %c0_i32_9 = arith.constant 0 : i32
    %11 = arith.cmpi ne, %10, %c0_i32_9 : i32
    scf.if %11 {
      %c0_10 = arith.constant 0 : index
      %c0_11 = arith.constant 0 : index
      %12 = vector.load %arg7[%c0_10, %c0_11] : memref<16x256xf32, #tpu.memory_space<vmem>>, vector<16x256xf32>
      %c0_12 = arith.constant 0 : index
      %c0_13 = arith.constant 0 : index
      %13 = vector.load %arg5[%c0_12, %c0_13] : memref<1x256xf32, #tpu.memory_space<vmem>>, vector<1x256xf32>
      %14 = vector.broadcast %13 : vector<1x256xf32> to vector<16x256xf32>
      %15 = arith.addf %12, %14 : vector<16x256xf32>
      %16 = vector.extract_strided_slice %15 {offsets = [0, 0], sizes = [16, 128], strides = [1, 1]} : vector<16x256xf32> to vector<16x128xf32>
      %17 = vector.extract_strided_slice %15 {offsets = [0, 128], sizes = [16, 128], strides = [1, 1]} : vector<16x256xf32> to vector<16x128xf32>
      %cst_14 = arith.constant 5.000000e-01 : f32
      %18 = vector.broadcast %cst_14 : f32 to vector<16x128xf32>
      %19 = arith.mulf %18, %17 : vector<16x128xf32>
      %cst_15 = arith.constant 0.707106769 : f32
      %20 = vector.broadcast %cst_15 : f32 to vector<16x128xf32>
      %21 = arith.mulf %17, %20 : vector<16x128xf32>
      %22 = math.erf %21 : vector<16x128xf32>
      %cst_16 = arith.constant 1.000000e+00 : f32
      %23 = vector.broadcast %cst_16 : f32 to vector<16x128xf32>
      %24 = arith.addf %23, %22 : vector<16x128xf32>
      %25 = arith.mulf %19, %24 : vector<16x128xf32>
      %26 = arith.mulf %16, %25 : vector<16x128xf32>
      %c0_17 = arith.constant 0 : index
      %c0_18 = arith.constant 0 : index
      %27 = vector.load %arg6[%c0_17, %c0_18] : memref<16x128xf32, #tpu.memory_space<vmem>>, vector<16x128xf32>
      tpu.vector_store %arg6[%c0_17, %c0_18], %26 {strides = array<i32>} : memref<16x128xf32, #tpu.memory_space<vmem>>, vector<16x128xf32>,
    } else {
    }
    return
  }
  func.func @transform_0(%arg0: i32, %arg1: i32, %arg2: i32) -> (i32, i32) {
    %c0_i32 = arith.constant 0 : i32
    return %arg1, %arg2 : i32, i32
  }
  func.func @transform_1(%arg0: i32, %arg1: i32, %arg2: i32) -> (i32, i32) {
    %c0_i32 = arith.constant 0 : i32
    return %arg2, %arg0 : i32, i32
  }
  func.func @transform_2(%arg0: i32, %arg1: i32, %arg2: i32) -> (i32, i32) {
    %c0_i32 = arith.constant 0 : i32
    %c0_i32_0 = arith.constant 0 : i32
    return %c0_i32, %arg0 : i32, i32
  }
  func.func @transform_3(%arg0: i32, %arg1: i32, %arg2: i32) -> (i32, i32) {
    %c0_i32 = arith.constant 0 : i32
    return %arg1, %arg0 : i32, i32
  }
}

</mosaic_0001>

<llo_original>
// kernel: _geglu_forward.1
$region0: #{_geglu_forward.1}
  #allocation0 [shape = 'u32[]', space=smem, size = 0x4, offset = 0x4, fixed_abs, tag = 'smem constant byte address 0x4 - core index']
  #allocation1 [shape = 'u32[144,128]{1,0:T(1,128)}', space=vmem, size = 0x12000, scoped, tag = 'internal scratch']
  #allocation2 [shape = 'f32[16,256]{1,0:T(8,128)}', space=vmem, size = 0x4000, scoped, tag = 'scratch operand']
  %s0 = inlined_call_operand.hbm [shape: f32[16,32], index: 0, kind: input, shape index: {}]
  %s1 = inlined_call_operand.hbm [shape: f32[32,256], index: 1, kind: input, shape index: {}]
  %s2 = inlined_call_operand.vmem [shape: f32[1,256], index: 2, kind: input, shape index: {}]
  %s3 = inlined_call_operand.vmem [shape: f32[16,128], index: 3, kind: output, shape index: {}]
  %s4 = sld [smem:[#allocation0]]
  $region38: #{_geglu_forward.1} parent=0
    _
  %s6 = ssub.s32 1, %s4
  %s7 = scalar_select 0, %s6, %s4
  $region1: #{_geglu_forward.1} parent=0
    #allocation3 [shape = 'u8[8192]{0}', space=vmem, size = 0x2000, scoped, tag = 'input window, operand 0, single buffered']
    #allocation4 [shape = 's32[1]{0}', space=sflag, size = 0x4, scoped, tag = 'scoped memory for _geglu_forward.1']
    #allocation5 [shape = 'u8[32768]{0}', space=vmem, size = 0x8000, scoped, tag = 'input window, operand 1, single buffered']
    #allocation6 [shape = 's32[1]{0}', space=sflag, size = 0x4, scoped, tag = 'scoped memory for _geglu_forward.1']
    %8 = vsyncpa [#allocation4], 0
    %9 = vsyncpa [#allocation6], 0
    // Predicated region
    $region2: #{_geglu_forward.1} parent=1 // pred_check
      _
    $region3: #{_geglu_forward.1} parent=1 // pred_check_branch
      %11 = sbr.rel (0) target = $region5
    $region4: #{_geglu_forward.1} parent=1 // pred_region
      %s13 = ssub.s32 256, 256
      %14 = vsyncadd [#allocation4], %s13
      %s15 = sshll.u32 [#allocation3], 4
      %s16 = int_to_ptr.vmem [resolvable:$true] %s15
      %21 = dma.hbm_to_vmem [thread:$0]  %s0, 256, %s16, [#allocation4], 128, 128, 8
    $region5: #{_geglu_forward.1} parent=1 // pred_fallthru
      _
    // Predicated region
    $region6: #{_geglu_forward.1} parent=1 // pred_check
      _
    $region7: #{_geglu_forward.1} parent=1 // pred_check_branch
      %23 = sbr.rel (0) target = $region9
    $region8: #{_geglu_forward.1} parent=1 // pred_region
      %s25 = ssub.s32 1024, 1024
      %26 = vsyncadd [#allocation6], %s25
      %s27 = sshll.u32 [#allocation5], 4
      %s28 = int_to_ptr.vmem [resolvable:$true] %s27
      %33 = dma.hbm_to_vmem [thread:$0]  %s1, 1024, %s28, [#allocation6], 256, 256, 16
    $region9: #{_geglu_forward.1} parent=1 // pred_fallthru
      _
    // Predicated region
    $region10: #{_geglu_forward.1} parent=1 // pred_check
      _
    $region11: #{_geglu_forward.1} parent=1 // pred_check_branch
      %35 = sbr.rel (0) target = $region13
    $region12: #{_geglu_forward.1} parent=1 // pred_region
      _
    $region13: #{_geglu_forward.1} parent=1 // pred_fallthru
      _
    // Predicated region
    $region14: #{_geglu_forward.1} parent=1 // pred_check
      _
    $region15: #{_geglu_forward.1} parent=1 // pred_check_branch
      %37 = sbr.rel (0) target = $region17
    $region16: #{_geglu_forward.1} parent=1 // pred_region
      %38 = dma.done [#allocation4], 256
    $region17: #{_geglu_forward.1} parent=1 // pred_fallthru
      _
    // Predicated region
    $region18: #{_geglu_forward.1} parent=1 // pred_check
      _
    $region19: #{_geglu_forward.1} parent=1 // pred_check_branch
      %40 = sbr.rel (0) target = $region21
    $region20: #{_geglu_forward.1} parent=1 // pred_region
      %41 = dma.done [#allocation6], 1024
    $region21: #{_geglu_forward.1} parent=1 // pred_fallthru
      _
    %p42 = scmp.eq.s32.totalorder 0, 0
    // Predicated region
    $region22: #{_geglu_forward.1} parent=1 // pred_check
      %p43 = pneg %p42
    $region23: #{_geglu_forward.1} parent=1 // pred_check_branch
      %45 = sbr.rel (%p43) target = $region25
    $region24: #{_geglu_forward.1} parent=1 // pred_region
      %46 = vst [vmem:[#allocation2] sm:$0xff] 0.0
      %47 = vst [vmem:[#allocation2 + $0x8] sm:$0xff] 0.0
      %48 = vst [vmem:[#allocation2 + $0x10] sm:$0xff] 0.0
      %49 = vst [vmem:[#allocation2 + $0x18] sm:$0xff] 0.0
    $region25: #{_geglu_forward.1} parent=1 // pred_fallthru
      _
    %v50 = vld [vmem:[#allocation2] sm:$0xff]
    %v51 = vld [vmem:[#allocation2 + $0x8] sm:$0xff]
    %v52 = vld [vmem:[#allocation2 + $0x10] sm:$0xff]
    %v53 = vld [vmem:[#allocation2 + $0x18] sm:$0xff]
    %v54 = vld [vmem:[#allocation3] sm:$0xff]
    %v55 = vld [vmem:[#allocation3 + $0x8] sm:$0xff]
    %v56 = vld [vmem:[#allocation5] sm:$0xff]
    %v57 = vld [vmem:[#allocation5 + $0x8] sm:$0xff]
    %v58 = vld [vmem:[#allocation5 + $0x10] sm:$0xff]
    %v59 = vld [vmem:[#allocation5 + $0x18] sm:$0xff]
    %v60 = vld [vmem:[#allocation5 + $0x20] sm:$0xff]
    %v61 = vld [vmem:[#allocation5 + $0x28] sm:$0xff]
    %v62 = vld [vmem:[#allocation5 + $0x30] sm:$0xff]
    %v63 = vld [vmem:[#allocation5 + $0x38] sm:$0xff]
    %vm64 = vcmask 261120
    %v66 = vsel %vm64, %v54, 0
    %v69 = vsel %vm64, %v55, 0
    %71 = vmatprep.subr.mxu0 %v57
    %72 = vmatpush1.msra.mxu0 %v56
    %73 = vmatprep.subr.mxu0 %v59
    %74 = vmatpush1.msra.mxu0 %v58
    %75 = vmatprep.subr.mxu0 %v61
    %76 = vmatpush1.msra.mxu0 %v60
    %77 = vmatprep.subr.mxu0 %v63
    %78 = vmatpush1.msra.mxu0 %v62
    %79 = vmatprep.subr.mxu0 0.0
    %80 = vmatpush1.msra.mxu0 0.0
    %81 = vmatprep.subr.mxu0 0.0
    %82 = vmatpush1.msra.mxu0 0.0
    %83 = vmatprep.subr.mxu0 0.0
    %84 = vmatpush1.msra.mxu0 0.0
    %85 = vmatprep.subr.mxu0 0.0
    %86 = vmatpush1.msra.mxu0 0.0
    %87 = vmatprep.subr.mxu0 0.0
    %88 = vmatpush1.msra.mxu0 0.0
    %89 = vmatprep.subr.mxu0 0.0
    %90 = vmatpush1.msra.mxu0 0.0
    %91 = vmatprep.subr.mxu0 0.0
    %92 = vmatpush1.msra.mxu0 0.0
    %93 = vmatprep.subr.mxu0 0.0
    %94 = vmatpush1.msra.mxu0 0.0
    %95 = vmatprep.subr.mxu0 0.0
    %96 = vmatpush1.msra.mxu0 0.0
    %97 = vmatprep.subr.mxu0 0.0
    %98 = vmatpush1.msra.mxu0 0.0
    %99 = vmatprep.subr.mxu0 0.0
    %100 = vmatpush1.msra.mxu0 0.0
    %101 = vmatprep.subr.mxu0 0.0
    %102 = vmatpush1.msra.mxu0 0.0
    %103 = vmatprep.subr.mxu0 0.0
    %104 = vmatpush1.msra.mxu0 0.0
    %105 = vmatprep.subr.mxu0 0.0
    %106 = vmatpush1.msra.mxu0 0.0
    %107 = vmatprep.subr.mxu0 0.0
    %108 = vmatpush1.msra.mxu0 0.0
    %109 = vmatprep.subr.mxu0 0.0
    %110 = vmatpush1.msra.mxu0 0.0
    %111 = vmatprep.subr.mxu0 0.0
    %112 = vmatpush1.msra.mxu0 0.0
    %113 = vmatprep.subr.mxu0 0.0
    %114 = vmatpush1.msra.mxu0 0.0
    %115 = vmatprep.subr.mxu0 0.0
    %116 = vmatpush1.msra.mxu0 0.0
    %117 = vmatprep.subr.mxu0 0.0
    %118 = vmatpush1.msra.mxu0 0.0
    %119 = vmatprep.subr.mxu0 0.0
    %120 = vmatpush1.msra.mxu0 0.0
    %121 = vmatprep.subr.mxu0 0.0
    %122 = vmatpush1.msra.mxu0 0.0
    %123 = vmatprep.subr.mxu0 0.0
    %124 = vmatpush1.msra.mxu0 0.0
    %125 = vmatprep.subr.mxu0 0.0
    %126 = vmatpush1.msra.mxu0 0.0
    %127 = vmatprep.subr.mxu0 0.0
    %128 = vmatpush1.msra.mxu0 0.0
    %129 = vmatprep.subr.mxu0 0.0
    %130 = vmatpush1.msra.mxu0 0.0
    %131 = vmatprep.subr.mxu0 0.0
    %132 = vmatpush1.msra.mxu0 0.0
    %133 = vmatprep.subr.mxu0 0.0
    %134 = vmatpush1.msra.mxu0 0.0
    %135 = vmatprep.mubr.f32.mxu0 0.0
    %136 = vmatmul.mubr.f32.gmra.mrb[0].mxu0 %v66
    %v137 = vpop.f32.mrb[0].mxu0
    %v138 = vadd.f32 0.0, %v137
    %v139 = vpop.f32.mrb[0].mxu0
    %v140 = vadd.f32 0.0, %v139
    %141 = vmatprep.mubr.f32.mxu0 0.0
    %142 = vmatmul.mubr.f32.gmra.mrb[0].mxu0 %v69
    %v143 = vpop.f32.mrb[0].mxu0
    %v144 = vadd.f32 0.0, %v143
    %v145 = vpop.f32.mrb[0].mxu0
    %v146 = vadd.f32 0.0, %v145
    %147 = vdwg.mxu0
    %v148 = vadd.f32 %v50, %v138
    %v149 = vadd.f32 %v51, %v140
    %v150 = vadd.f32 %v52, %v144
    %v151 = vadd.f32 %v53, %v146
    %152 = vst [vmem:[#allocation2] sm:$0xff] %v148
    %153 = vst [vmem:[#allocation2 + $0x8] sm:$0xff] %v149
    %154 = vst [vmem:[#allocation2 + $0x10] sm:$0xff] %v150
    %155 = vst [vmem:[#allocation2 + $0x18] sm:$0xff] %v151
    // Predicated region
    $region26: #{_geglu_forward.1} parent=1 // pred_check
      %p156 = pneg %p42
    $region27: #{_geglu_forward.1} parent=1 // pred_check_branch
      %158 = sbr.rel (%p156) target = $region29
    $region28: #{_geglu_forward.1} parent=1 // pred_region
      %v159 = vld [vmem:[#allocation2] sm:$0xff]
      %v160 = vld [vmem:[#allocation2 + $0x8] sm:$0xff]
      %v161 = vld [vmem:[#allocation2 + $0x10] sm:$0xff]
      %v162 = vld [vmem:[#allocation2 + $0x18] sm:$0xff]
      %v163 = vld [vmem:[%s2] sm:$0x3]
      %v165 = vlaneseq
      %v166 = vshrl.u32 %v165, 7
      %v167 = vsub.s32 0, %v166
      %v168 = vrot.slane %v163, %v167
      %v169 = vlaneseq
      %v170 = vshrl.u32 %v169, 7
      %v171 = vsub.s32 1, %v170
      %v172 = vrot.slane %v163, %v171
      %v175 = vadd.f32 %v159, %v168
      %v176 = vadd.f32 %v160, %v172
      %v177 = vadd.f32 %v161, %v168
      %v178 = vadd.f32 %v162, %v172
      %v179 = vmul.f32 %v176, 0.5
      %v180 = vmul.f32 %v178, 0.5
      %v181 = vmul.f32 %v176, 0.70710677
      %v182 = vmul.f32 %v178, 0.70710677
      %v183 = verf.f32.pop %v181
      %v184 = verf.f32.pop %v182
      %v185 = vadd.f32 %v183, 1.0
      %v186 = vadd.f32 %v184, 1.0
      %v187 = vmul.f32 %v179, %v185
      %v188 = vmul.f32 %v180, %v186
      %v189 = vmul.f32 %v175, %v187
      %v190 = vmul.f32 %v177, %v188
      %191 = vst [vmem:[%s3] sm:$0xff] %v189
      %192 = vst [vmem:[%s3 + $0x8] sm:$0xff] %v190
    $region29: #{_geglu_forward.1} parent=1 // pred_fallthru
      _
    // Predicated region
    $region30: #{_geglu_forward.1} parent=1 // pred_check
      _
    $region31: #{_geglu_forward.1} parent=1 // pred_check_branch
      %194 = sbr.rel (0) target = $region33
    $region32: #{_geglu_forward.1} parent=1 // pred_region
      _
    $region33: #{_geglu_forward.1} parent=1 // pred_fallthru
      _
    // Predicated region
    $region34: #{_geglu_forward.1} parent=1 // pred_check
      _
    $region35: #{_geglu_forward.1} parent=1 // pred_check_branch
      %196 = sbr.rel (0) target = $region37
    $region36: #{_geglu_forward.1} parent=1 // pred_region
      _
    $region37: #{_geglu_forward.1} parent=1 // pred_fallthru
      _
    %197 = vsyncpa [#allocation4], 1
    %198 = vsyncpa [#allocation6], 1

</llo_original>
